<compile_context>
chip_gen: v7x
topology: tpu7x:2x2x1
jax: 0.10.0
libtpu: 0.0.40
codegen_flags: <defaults>
</compile_context>

<pallas_src>
import functools

import jax
import jax.numpy as jnp
from jax.experimental import pallas as pl
from jax.experimental.pallas import tpu as pltpu


def _round_up(x, m):
    return (x + m - 1) // m * m


def pam_kernel(x_q_ref, k_ref, v_ref, wq_ref, bq_ref, gamma_ref, out_ref,
               q_scr, m_scr, l_scr, acc_scr, *, n_real, tile, needs_mask):
    ki = pl.program_id(2)

    # ---- per-query-tile init (runs once per (b, qi)) ----------------------
    @pl.when(ki == 0)
    def _init():
        x_q = x_q_ref[0].astype(jnp.bfloat16)                        # (C, Tq)
        q = jnp.dot(wq_ref[...], x_q,
                    preferred_element_type=jnp.float32) + bq_ref[...]
        q_scr[...] = q.astype(jnp.bfloat16)                          # (C8p, Tq)
        m_scr[...] = jnp.full(m_scr.shape, -jnp.inf, dtype=m_scr.dtype)
        l_scr[...] = jnp.zeros(l_scr.shape, dtype=l_scr.dtype)
        acc_scr[...] = jnp.zeros(acc_scr.shape, dtype=acc_scr.dtype)

    # ---- pre-projected bf16 k / v tiles (streamed from HBM) ---------------
    k = k_ref[0]                                                     # (C8p, Tk)
    v = v_ref[0]                                                     # (C,   Tk)

    # e[j, i] = <k[:, j], q[:, i]> == energy[i, j]; contract the channel axis
    # of both operands so no transpose is ever materialized.
    e = jax.lax.dot_general(
        k, q_scr[...], (((0,), (0,)), ((), ())),
        preferred_element_type=jnp.float32)                          # (Tk, Tq)

    # Mask padded key rows (key index >= n_real).  Static skip when no padding
    # exists; otherwise a (Tk, 1) iota + single broadcast select.
    if needs_mask:
        key_idx = ki * tile + jax.lax.broadcasted_iota(jnp.int32, (tile, 1), 0)
        e = jnp.where(key_idx < n_real, e, -1e30)

    # ---- online softmax over the key axis (axis 0 of e) -------------------
    m_prev = m_scr[...]                                              # (1, Tq)
    m_new = jnp.maximum(m_prev, jnp.max(e, axis=0, keepdims=True))   # (1, Tq)
    alpha = jnp.exp(m_prev - m_new)                                  # (1, Tq)
    p = jnp.exp(e - m_new)                                           # (Tk, Tq)

    m_scr[...] = m_new
    l_scr[...] = alpha * l_scr[...] + jnp.sum(p, axis=0, keepdims=True)
    acc_scr[...] = alpha * acc_scr[...] + jnp.dot(
        v, p.astype(jnp.bfloat16),
        preferred_element_type=jnp.float32)                          # (C, Tq)

    # ---- epilogue: normalize, scale by gamma, add residual ----------------
    @pl.when(ki == pl.num_programs(2) - 1)
    def _fini():
        inv_l = pl.reciprocal(l_scr[...], approx=True)               # (1, Tq)
        out_ref[0] = (gamma_ref[0, 0] * (acc_scr[...] * inv_l)
                      + x_q_ref[0]).astype(out_ref.dtype)


def _vmem_bytes(C, C8p, T):
    """Rough per-step VMEM working set (double-buffered blocks + scratch)."""
    blk = 2 * (C * T * 4        # x query block (f32)
               + C8p * T * 2    # k block (bf16)
               + C * T * 2      # v block (bf16)
               + C * T * 4)     # out block (f32)
    wgt = 2 * (C8p * max(C, 128) * 2 + C8p * 128 * 4)   # Wq, bq (lane-padded)
    scr = C8p * T * 2 + 2 * 8 * T * 4 + C * T * 4        # q_scr, m/l, acc
    tmp = 4 * T * T * 4                                   # e / p intermediates
    return blk + wgt + scr + tmp


def pam_forward(x_nchw, wq, bq, wk, bk, wv, bv, gamma, *, max_tile=1024):
    """x_nchw: (B, C, H, W) float32. Returns (B, C, H, W)."""
    B, C, H, W = x_nchw.shape
    C8 = wq.shape[0]
    N = H * W

    # bf16 packs 16 sublane rows per vreg; pad q/k channels to a 16-multiple.
    C8p = _round_up(max(C8, 16), 16)

    # Lane-dense tile (multiple of 128); shrink until the VMEM budget fits a
    # target that is safe on every generation (v7x has only 64 MiB per TC).
    vmem_target = 40 * 1024 * 1024
    T = min(_round_up(N, 128), _round_up(max_tile, 128))
    while T > 128 and _vmem_bytes(C, C8p, T) > vmem_target:
        T -= 128
    Npad = _round_up(N, T)
    nq = Npad // T
    nk = Npad // T
    needs_mask = Npad != N

    x = x_nchw.reshape(B, C, N).astype(jnp.float32)
    if needs_mask:
        x = jnp.pad(x, ((0, 0), (0, 0), (0, Npad - N)))

    # ---- precompute k / v once per batch (wrapper-side 1x1 convs) ---------
    k = jnp.einsum('oc,bcn->bon', wk, x) + bk[None, :, None]         # (B, C8, Npad)
    if C8p != C8:
        k = jnp.pad(k, ((0, 0), (0, C8p - C8), (0, 0)))               # zero rows: inert
    k = k.astype(jnp.bfloat16)
    v = (jnp.einsum('oc,bcn->bon', wv, x)
         + bv[None, :, None]).astype(jnp.bfloat16)                    # (B, C, Npad)

    # q projection stays in-kernel; pad its weight rows (zero rows + zero bias
    # contribute nothing to the energy).
    wq_p = jnp.zeros((C8p, C), jnp.bfloat16).at[:C8].set(wq.astype(jnp.bfloat16))
    bq_p = jnp.zeros((C8p, 1), jnp.float32).at[:C8, 0].set(bq.astype(jnp.float32))
    gamma2 = gamma.reshape(1, 1).astype(jnp.float32)

    kernel = functools.partial(pam_kernel, n_real=N, tile=T, needs_mask=needs_mask)

    # Cost estimate for what the pallas_call itself does (k/v projections are
    # now outside, in plain XLA ops).
    flops = int(B * (2 * Npad * Npad * (C8p + C)     # QK^T + P@V
                     + 2 * Npad * C * C8p))          # q projection (once per q tile)
    bytes_accessed = int(B * (C * Npad * 4                     # x query blocks
                              + nq * Npad * (C8p + C) * 2      # streamed bf16 k+v
                              + C * Npad * 4))                 # output
    cost = pl.CostEstimate(flops=flops,
                           transcendentals=int(B * Npad * Npad),
                           bytes_accessed=bytes_accessed)

    vmem_limit = min(_vmem_bytes(C, C8p, T) + (8 << 20), 96 << 20)

    out = pl.pallas_call(
        kernel,
        out_shape=jax.ShapeDtypeStruct((B, C, Npad), jnp.float32),
        grid_spec=pltpu.PrefetchScalarGridSpec(
            num_scalar_prefetch=0,
            grid=(B, nq, nk),
            in_specs=[
                pl.BlockSpec((1, C, T), lambda b, qi, ki: (b, 0, qi)),     # x (query tile)
                pl.BlockSpec((1, C8p, T), lambda b, qi, ki: (b, 0, ki)),   # k (bf16)
                pl.BlockSpec((1, C, T), lambda b, qi, ki: (b, 0, ki)),     # v (bf16)
                pl.BlockSpec((C8p, C), lambda b, qi, ki: (0, 0)),          # Wq
                pl.BlockSpec((C8p, 1), lambda b, qi, ki: (0, 0)),          # bq
                pl.BlockSpec(memory_space=pltpu.MemorySpace.SMEM),         # gamma scalar
            ],
            out_specs=pl.BlockSpec((1, C, T), lambda b, qi, ki: (b, 0, qi)),
            scratch_shapes=[
                pltpu.VMEM((C8p, T), jnp.bfloat16),   # cached projected q tile
                pltpu.VMEM((1, T), jnp.float32),      # running max
                pltpu.VMEM((1, T), jnp.float32),      # running denominator
                pltpu.VMEM((C, T), jnp.float32),      # unnormalized P@V accumulator
            ]),
        compiler_params=pltpu.CompilerParams(
            # B*nq form the megacore-parallel extent (keep it even on v7x).
            dimension_semantics=("parallel", "parallel", "arbitrary"),
            vmem_limit_bytes=vmem_limit),
        cost_estimate=cost,
    )(x, k, v, wq_p, bq_p, gamma2)

    return out[:, :, :N].reshape(B, C, H, W)


def pam_reference(x_nchw, wq, bq, wk, bk, wv, bv, gamma):
    """Pure-JAX f32 reference mirroring the PyTorch forward exactly."""
    B, C, H, W = x_nchw.shape
    N = H * W
    x = x_nchw.reshape(B, C, N)
    q = jnp.einsum('oc,bcn->bon', wq, x) + bq[None, :, None]   # (B, C8, N)
    k = jnp.einsum('oc,bcn->bon', wk, x) + bk[None, :, None]   # (B, C8, N)
    v = jnp.einsum('oc,bcn->bon', wv, x) + bv[None, :, None]   # (B, C,  N)
    energy = jnp.einsum('bcn,bcm->bnm', q, k)                  # (B, N, N)
    attn = jax.nn.softmax(energy, axis=-1)
    out = jnp.einsum('bcm,bnm->bcn', v, attn)                  # (B, C, N)
    out = gamma[0] * out + x
    return out.reshape(B, C, H, W)


if __name__ == "__main__":
    B, C, H, W = 2, 16, 8, 8        # in_dim=16 -> query/key channels = 2
    C8 = C // 8

    key = jax.random.PRNGKey(0)
    k_x, k_wq, k_bq, k_wk, k_bk, k_wv, k_bv = jax.random.split(key, 7)

    x = jax.random.normal(k_x, (B, C, H, W), dtype=jnp.float32)
    # 1x1 conv weights stored as (Cout, Cin), per PAM.__init__.
    wq = jax.random.normal(k_wq, (C8, C), dtype=jnp.float32) * 0.1
    bq = jax.random.normal(k_bq, (C8,), dtype=jnp.float32) * 0.1
    wk = jax.random.normal(k_wk, (C8, C), dtype=jnp.float32) * 0.1
    bk = jax.random.normal(k_bk, (C8,), dtype=jnp.float32) * 0.1
    wv = jax.random.normal(k_wv, (C, C), dtype=jnp.float32) * 0.1
    bv = jax.random.normal(k_bv, (C,), dtype=jnp.float32) * 0.1
    # PyTorch inits gamma to 0 (out == x); use 0.5 so the attention path
    # actually contributes to the checked output.
    gamma = jnp.array([0.5], dtype=jnp.float32)

    out = pam_forward(x, wq, bq, wk, bk, wv, bv, gamma)
    out = jax.block_until_ready(out)

    ref = pam_reference(x, wq, bq, wk, bk, wv, bv, gamma)
    assert out.shape == (B, C, H, W)
    # bf16 MXU inputs (f32 accumulation / softmax) -> relaxed tolerance; does
    # not match the f32 PyTorch reference bit-for-bit by design.
    assert jnp.allclose(out, ref, atol=2e-2, rtol=2e-2), "mismatch vs reference"

    print("KERNEL_OK")
</pallas_src>

<mosaic_0001>
module attributes {stable_mosaic.version = 11 : i64} {
  func.func @pam_kernel(%arg0: i32, %arg1: i32, %arg2: i32, %arg3: memref<1x16x128xf32, #tpu.memory_space<vmem>>, %arg4: memref<1x16x128xbf16, #tpu.memory_space<vmem>>, %arg5: memref<1x16x128xbf16, #tpu.memory_space<vmem>>, %arg6: memref<16x16xbf16, #tpu.memory_space<vmem>>, %arg7: memref<16x1xf32, #tpu.memory_space<vmem>>, %arg8: memref<1x1xf32, #tpu.memory_space<smem>>, %arg9: memref<1x16x128xf32, #tpu.memory_space<vmem>>, %arg10: memref<16x128xbf16, #tpu.memory_space<vmem>>, %arg11: memref<1x128xf32, #tpu.memory_space<vmem>>, %arg12: memref<1x128xf32, #tpu.memory_space<vmem>>, %arg13: memref<16x128xf32, #tpu.memory_space<vmem>>) attributes {dimension_semantics = [#tpu.dimension_semantics<parallel>, #tpu.dimension_semantics<parallel>, #tpu.dimension_semantics<arbitrary>], iteration_bounds = array<i64: 2, 1, 1>, scalar_prefetch = 0 : i64, scratch_operands = 4 : i64, tpu.core_type = #tpu.core_type<tc>, window_params = [{transform_indices = @transform_0, window_bounds = array<i64: 1, 16, 128>}, {transform_indices = @transform_1, window_bounds = array<i64: 1, 16, 128>}, {transform_indices = @transform_2, window_bounds = array<i64: 1, 16, 128>}, {pipeline_mode = #tpu.pipeline_mode<synchronous>, transform_indices = @transform_3, window_bounds = array<i64: 16, 16>}, {pipeline_mode = #tpu.pipeline_mode<synchronous>, transform_indices = @transform_4, window_bounds = array<i64: 16, 1>}, {transform_indices = @transform_5, window_bounds = array<i64: 1, 1>}, {transform_indices = @transform_6, window_bounds = array<i64: 1, 16, 128>}]} {
    %c0_i32 = arith.constant 0 : i32
    %0 = arith.cmpi eq, %arg2, %c0_i32 : i32
    %1 = arith.extui %0 : i1 to i32
    %c0_i32_0 = arith.constant 0 : i32
    %2 = arith.cmpi ne, %1, %c0_i32_0 : i32
    scf.if %2 {
      %c0_26 = arith.constant 0 : index
      %c0_27 = arith.constant 0 : index
      %c0_28 = arith.constant 0 : index
      %45 = vector.load %arg3[%c0_26, %c0_27, %c0_28] : memref<1x16x128xf32, #tpu.memory_space<vmem>>, vector<1x16x128xf32>
      %46 = vector.shape_cast %45 : vector<1x16x128xf32> to vector<16x128xf32>
      %47 = arith.truncf %46 : vector<16x128xf32> to vector<16x128xbf16>
      %c0_29 = arith.constant 0 : index
      %c0_30 = arith.constant 0 : index
      %48 = vector.load %arg6[%c0_29, %c0_30] : memref<16x16xbf16, #tpu.memory_space<vmem>>, vector<16x16xbf16>
      %cst_31 = arith.constant dense<0.000000e+00> : vector<16x128xf32>
      %49 = tpu.matmul %48, %47, %cst_31 {dimension_numbers = #tpu.dot_dimension_numbers<[1], [0], [0], [1], [0, 0, 1, 1], [], []>} : vector<16x16xbf16>, vector<16x128xbf16>, vector<16x128xf32> -> vector<16x128xf32>
      %c0_32 = arith.constant 0 : index
      %c0_33 = arith.constant 0 : index
      %50 = vector.load %arg7[%c0_32, %c0_33] : memref<16x1xf32, #tpu.memory_space<vmem>>, vector<16x1xf32>
      %51 = vector.broadcast %50 : vector<16x1xf32> to vector<16x128xf32>
      %52 = arith.addf %49, %51 : vector<16x128xf32>
      %53 = arith.truncf %52 : vector<16x128xf32> to vector<16x128xbf16>
      %c0_34 = arith.constant 0 : index
      %c0_35 = arith.constant 0 : index
      %54 = vector.load %arg10[%c0_34, %c0_35] : memref<16x128xbf16, #tpu.memory_space<vmem>>, vector<16x128xbf16>
      tpu.vector_store %arg10[%c0_34, %c0_35], %53 {strides = array<i32>} : memref<16x128xbf16, #tpu.memory_space<vmem>>, vector<16x128xbf16>,
      %cst_36 = arith.constant 0xFF800000 : f32
      %55 = vector.broadcast %cst_36 : f32 to vector<1x128xf32>
      %c0_37 = arith.constant 0 : index
      %c0_38 = arith.constant 0 : index
      %56 = vector.load %arg11[%c0_37, %c0_38] : memref<1x128xf32, #tpu.memory_space<vmem>>, vector<1x128xf32>
      tpu.vector_store %arg11[%c0_37, %c0_38], %55 {strides = array<i32>} : memref<1x128xf32, #tpu.memory_space<vmem>>, vector<1x128xf32>,
      %cst_39 = arith.constant 0.000000e+00 : f32
      %57 = vector.broadcast %cst_39 : f32 to vector<1x128xf32>
      %c0_40 = arith.constant 0 : index
      %c0_41 = arith.constant 0 : index
      %58 = vector.load %arg12[%c0_40, %c0_41] : memref<1x128xf32, #tpu.memory_space<vmem>>, vector<1x128xf32>
      tpu.vector_store %arg12[%c0_40, %c0_41], %57 {strides = array<i32>} : memref<1x128xf32, #tpu.memory_space<vmem>>, vector<1x128xf32>,
      %cst_42 = arith.constant 0.000000e+00 : f32
      %59 = vector.broadcast %cst_42 : f32 to vector<16x128xf32>
      %c0_43 = arith.constant 0 : index
      %c0_44 = arith.constant 0 : index
      %60 = vector.load %arg13[%c0_43, %c0_44] : memref<16x128xf32, #tpu.memory_space<vmem>>, vector<16x128xf32>
      tpu.vector_store %arg13[%c0_43, %c0_44], %59 {strides = array<i32>} : memref<16x128xf32, #tpu.memory_space<vmem>>, vector<16x128xf32>,
    } else {
    }
    %c0 = arith.constant 0 : index
    %c0_1 = arith.constant 0 : index
    %c0_2 = arith.constant 0 : index
    %3 = vector.load %arg4[%c0, %c0_1, %c0_2] : memref<1x16x128xbf16, #tpu.memory_space<vmem>>, vector<1x16x128xbf16>
    %4 = vector.shape_cast %3 : vector<1x16x128xbf16> to vector<16x128xbf16>
    %c0_3 = arith.constant 0 : index
    %c0_4 = arith.constant 0 : index
    %c0_5 = arith.constant 0 : index
    %5 = vector.load %arg5[%c0_3, %c0_4, %c0_5] : memref<1x16x128xbf16, #tpu.memory_space<vmem>>, vector<1x16x128xbf16>
    %6 = vector.shape_cast %5 : vector<1x16x128xbf16> to vector<16x128xbf16>
    %c0_6 = arith.constant 0 : index
    %c0_7 = arith.constant 0 : index
    %7 = vector.load %arg10[%c0_6, %c0_7] : memref<16x128xbf16, #tpu.memory_space<vmem>>, vector<16x128xbf16>
    %cst = arith.constant dense<0.000000e+00> : vector<128x128xf32>
    %8 = tpu.matmul %4, %7, %cst {dimension_numbers = #tpu.dot_dimension_numbers<[0], [0], [1], [1], [0, 1, 1, 1], [], []>} : vector<16x128xbf16>, vector<16x128xbf16>, vector<128x128xf32> -> vector<128x128xf32>
    %c128_i32 = arith.constant 128 : i32
    %9 = arith.muli %arg2, %c128_i32 : i32
    %10 = tpu.iota {dimensions = array<i32: 0>} : vector<128x1xi32>
    %11 = vector.broadcast %9 : i32 to vector<128x1xi32>
    %12 = arith.addi %11, %10 : vector<128x1xi32>
    %c64_i32 = arith.constant 64 : i32
    %13 = vector.broadcast %c64_i32 : i32 to vector<128x1xi32>
    %14 = arith.cmpi slt, %12, %13 : vector<128x1xi32>
    %cst_8 = arith.constant -1.000000e+30 : f32
    %15 = vector.shape_cast %14 : vector<128x1xi1> to vector<128x1xi1>
    %16 = vector.broadcast %15 : vector<128x1xi1> to vector<128x128xi1>
    %17 = vector.broadcast %cst_8 : f32 to vector<128x128xf32>
    %18 = arith.select %16, %8, %17 : vector<128x128xi1>, vector<128x128xf32>
    %c0_9 = arith.constant 0 : index
    %c0_10 = arith.constant 0 : index
    %19 = vector.load %arg11[%c0_9, %c0_10] : memref<1x128xf32, #tpu.memory_space<vmem>>, vector<1x128xf32>
    %cst_11 = arith.constant dense<0xFF800000> : vector<128xf32>
    %20 = vector.multi_reduction <maximumf>, %18, %cst_11 [0] : vector<128x128xf32> to vector<128xf32>
    %21 = vector.shape_cast %20 : vector<128xf32> to vector<1x128xf32>
    %22 = arith.maximumf %19, %21 : vector<1x128xf32>
    %23 = arith.subf %19, %22 : vector<1x128xf32>
    %24 = math.exp %23 : vector<1x128xf32>
    %25 = vector.broadcast %22 : vector<1x128xf32> to vector<128x128xf32>
    %26 = arith.subf %18, %25 : vector<128x128xf32>
    %27 = math.exp %26 : vector<128x128xf32>
    %c0_12 = arith.constant 0 : index
    %c0_13 = arith.constant 0 : index
    %28 = vector.load %arg11[%c0_12, %c0_13] : memref<1x128xf32, #tpu.memory_space<vmem>>, vector<1x128xf32>
    tpu.vector_store %arg11[%c0_12, %c0_13], %22 {strides = array<i32>} : memref<1x128xf32, #tpu.memory_space<vmem>>, vector<1x128xf32>,
    %c0_14 = arith.constant 0 : index
    %c0_15 = arith.constant 0 : index
    %29 = vector.load %arg12[%c0_14, %c0_15] : memref<1x128xf32, #tpu.memory_space<vmem>>, vector<1x128xf32>
    %30 = arith.mulf %24, %29 : vector<1x128xf32>
    %cst_16 = arith.constant dense<0.000000e+00> : vector<128xf32>
    %31 = vector.multi_reduction <add>, %27, %cst_16 [0] : vector<128x128xf32> to vector<128xf32>
    %32 = vector.shape_cast %31 : vector<128xf32> to vector<1x128xf32>
    %33 = arith.addf %30, %32 : vector<1x128xf32>
    %c0_17 = arith.constant 0 : index
    %c0_18 = arith.constant 0 : index
    %34 = vector.load %arg12[%c0_17, %c0_18] : memref<1x128xf32, #tpu.memory_space<vmem>>, vector<1x128xf32>
    tpu.vector_store %arg12[%c0_17, %c0_18], %33 {strides = array<i32>} : memref<1x128xf32, #tpu.memory_space<vmem>>, vector<1x128xf32>,
    %c0_19 = arith.constant 0 : index
    %c0_20 = arith.constant 0 : index
    %35 = vector.load %arg13[%c0_19, %c0_20] : memref<16x128xf32, #tpu.memory_space<vmem>>, vector<16x128xf32>
    %36 = vector.broadcast %24 : vector<1x128xf32> to vector<16x128xf32>
    %37 = arith.mulf %36, %35 : vector<16x128xf32>
    %38 = arith.truncf %27 : vector<128x128xf32> to vector<128x128xbf16>
    %cst_21 = arith.constant dense<0.000000e+00> : vector<16x128xf32>
    %39 = tpu.matmul %6, %38, %cst_21 {dimension_numbers = #tpu.dot_dimension_numbers<[1], [0], [0], [1], [0, 0, 1, 1], [], []>} : vector<16x128xbf16>, vector<128x128xbf16>, vector<16x128xf32> -> vector<16x128xf32>
    %40 = arith.addf %37, %39 : vector<16x128xf32>
    %c0_22 = arith.constant 0 : index
    %c0_23 = arith.constant 0 : index
    %41 = vector.load %arg13[%c0_22, %c0_23] : memref<16x128xf32, #tpu.memory_space<vmem>>, vector<16x128xf32>
    tpu.vector_store %arg13[%c0_22, %c0_23], %40 {strides = array<i32>} : memref<16x128xf32, #tpu.memory_space<vmem>>, vector<16x128xf32>,
    %c0_i32_24 = arith.constant 0 : i32
    %42 = arith.cmpi eq, %arg2, %c0_i32_24 : i32
    %43 = arith.extui %42 : i1 to i32
    %c0_i32_25 = arith.constant 0 : i32
    %44 = arith.cmpi ne, %43, %c0_i32_25 : i32
    scf.if %44 {
      %c0_26 = arith.constant 0 : index
      %c0_27 = arith.constant 0 : index
      %45 = vector.load %arg12[%c0_26, %c0_27] : memref<1x128xf32, #tpu.memory_space<vmem>>, vector<1x128xf32>
      %46 = tpu.reciprocal %45 {approx = true} : vector<1x128xf32> -> vector<1x128xf32>
      %c0_28 = arith.constant 0 : index
      %c0_29 = arith.constant 0 : index
      %47 = memref.load %arg8[%c0_28, %c0_29] : memref<1x1xf32, #tpu.memory_space<smem>>
      %c0_30 = arith.constant 0 : index
      %c0_31 = arith.constant 0 : index
      %48 = vector.load %arg13[%c0_30, %c0_31] : memref<16x128xf32, #tpu.memory_space<vmem>>, vector<16x128xf32>
      %49 = vector.broadcast %46 : vector<1x128xf32> to vector<16x128xf32>
      %50 = arith.mulf %48, %49 : vector<16x128xf32>
      %51 = vector.broadcast %47 : f32 to vector<16x128xf32>
      %52 = arith.mulf %51, %50 : vector<16x128xf32>
      %c0_32 = arith.constant 0 : index
      %c0_33 = arith.constant 0 : index
      %c0_34 = arith.constant 0 : index
      %53 = vector.load %arg3[%c0_32, %c0_33, %c0_34] : memref<1x16x128xf32, #tpu.memory_space<vmem>>, vector<1x16x128xf32>
      %54 = vector.shape_cast %53 : vector<1x16x128xf32> to vector<16x128xf32>
      %55 = arith.addf %52, %54 : vector<16x128xf32>
      %c0_35 = arith.constant 0 : index
      %c0_36 = arith.constant 0 : index
      %c0_37 = arith.constant 0 : index
      %56 = vector.load %arg9[%c0_35, %c0_36, %c0_37] : memref<1x16x128xf32, #tpu.memory_space<vmem>>, vector<1x16x128xf32>
      %57 = vector.shape_cast %56 : vector<1x16x128xf32> to vector<16x128xf32>
      %58 = vector.shape_cast %55 : vector<16x128xf32> to vector<1x16x128xf32>
      tpu.vector_store %arg9[%c0_35, %c0_36, %c0_37], %58 {strides = array<i32>} : memref<1x16x128xf32, #tpu.memory_space<vmem>>, vector<1x16x128xf32>,
    } else {
    }
    return
  }
  func.func @transform_0(%arg0: i32, %arg1: i32, %arg2: i32) -> (i32, i32, i32) {
    %c0_i32 = arith.constant 0 : i32
    %c0_i32_0 = arith.constant 0 : i32
    return %arg0, %c0_i32, %arg1 : i32, i32, i32
  }
  func.func @transform_1(%arg0: i32, %arg1: i32, %arg2: i32) -> (i32, i32, i32) {
    %c0_i32 = arith.constant 0 : i32
    %c0_i32_0 = arith.constant 0 : i32
    return %arg0, %c0_i32, %arg2 : i32, i32, i32
  }
  func.func @transform_2(%arg0: i32, %arg1: i32, %arg2: i32) -> (i32, i32, i32) {
    %c0_i32 = arith.constant 0 : i32
    %c0_i32_0 = arith.constant 0 : i32
    return %arg0, %c0_i32, %arg2 : i32, i32, i32
  }
  func.func @transform_3(%arg0: i32, %arg1: i32, %arg2: i32) -> (i32, i32) {
    %c0_i32 = arith.constant 0 : i32
    %c0_i32_0 = arith.constant 0 : i32
    %c0_i32_1 = arith.constant 0 : i32
    return %c0_i32, %c0_i32_0 : i32, i32
  }
  func.func @transform_4(%arg0: i32, %arg1: i32, %arg2: i32) -> (i32, i32) {
    %c0_i32 = arith.constant 0 : i32
    %c0_i32_0 = arith.constant 0 : i32
    %c0_i32_1 = arith.constant 0 : i32
    return %c0_i32, %c0_i32_0 : i32, i32
  }
  func.func @transform_5(%arg0: i32, %arg1: i32, %arg2: i32) -> (i32, i32) {
    %c0_i32 = arith.constant 0 : i32
    %c0_i32_0 = arith.constant 0 : i32
    %c0_i32_1 = arith.constant 0 : i32
    return %c0_i32, %c0_i32_0 : i32, i32
  }
  func.func @transform_6(%arg0: i32, %arg1: i32, %arg2: i32) -> (i32, i32, i32) {
    %c0_i32 = arith.constant 0 : i32
    %c0_i32_0 = arith.constant 0 : i32
    return %arg0, %c0_i32, %arg1 : i32, i32, i32
  }
}

</mosaic_0001>

<llo_original>
// kernel: tpu_custom_call.1
$region0: #{tpu_custom_call.1}
  #allocation0 [shape = 'u32[]', space=smem, size = 0x4, offset = 0x4, fixed_abs, tag = 'smem constant byte address 0x4 - core index']
  #allocation1 [shape = 'u32[144,128]{1,0:T(1,128)}', space=vmem, size = 0x12000, scoped, tag = 'internal scratch']
  #allocation2 [shape = 'bf16[16,128]{1,0:T(16,128)(2,1)}', space=vmem, size = 0x1000, scoped, tag = 'scratch operand']
  #allocation3 [shape = 'f32[1,128]{1,0:T(1,128)}', space=vmem, size = 0x200, scoped, tag = 'scratch operand']
  #allocation4 [shape = 'f32[1,128]{1,0:T(1,128)}', space=vmem, size = 0x200, scoped, tag = 'scratch operand']
  #allocation5 [shape = 'f32[16,128]{1,0:T(8,128)}', space=vmem, size = 0x2000, scoped, tag = 'scratch operand']
  #allocation6 [shape = 'f32[1,1]{1,0:T(1,128)S(6)}', space=smem, size = 0x200, scoped, tag = 'scoped memory for tpu_custom_call.1']
  %s0 = inlined_call_operand.hbm [shape: f32[2,16,128], index: 0, kind: input, shape index: {}]
  %s1 = inlined_call_operand.vmem [shape: bf16[2,16,128], index: 1, kind: input, shape index: {}]
  %s2 = inlined_call_operand.hbm [shape: bf16[2,16,128], index: 2, kind: input, shape index: {}]
  %s3 = inlined_call_operand.vmem [shape: bf16[16,16], index: 3, kind: input, shape index: {}]
  %s4 = inlined_call_operand.vmem [shape: f32[16,1], index: 4, kind: input, shape index: {}]
  %s5 = inlined_call_operand.<no memory space> [shape: f32[1,1], index: 5, kind: input, shape index: {}]
  %s6 = inlined_call_operand.hbm [shape: f32[2,16,128], index: 6, kind: output, shape index: {}]
  %s7 = sld [smem:[#allocation0]]
  $region73: #{tpu_custom_call.1} parent=0
    _
  %s9 = ssub.s32 1, %s7
  %s10 = scalar_select 0, %s9, %s7
  %11 = sst [smem:[#allocation6]] %s5
  $region1: #{tpu_custom_call.1} parent=0
    #allocation7 [shape = 'u8[16384]{0}', space=vmem, size = 0x4000, scoped, tag = 'input window, operand 0']
    #allocation8 [shape = 's32[2]{0}', space=sflag, size = 0x8, scoped, tag = 'scoped memory for tpu_custom_call.1']
    #allocation9 [shape = 's32[2]{0}', space=sflag, size = 0x8, scoped, tag = 'scoped memory for tpu_custom_call.1']
    #allocation10 [shape = 'u8[8192]{0}', space=vmem, size = 0x2000, scoped, tag = 'input window, operand 2']
    #allocation11 [shape = 's32[2]{0}', space=sflag, size = 0x8, scoped, tag = 'scoped memory for tpu_custom_call.1']
    #allocation12 [shape = 'u8[16384]{0}', space=vmem, size = 0x4000, scoped, tag = 'output window, operand 0']
    %12 = vsyncpa [#allocation8], 0
    %s13 = scalar_lea.sflag [#allocation8], 1
    %14 = vsyncpa %s13, 0
    %15 = vsyncpa [#allocation11], 0
    %s16 = scalar_lea.sflag [#allocation11], 1
    %17 = vsyncpa %s16, 0
    %18 = vsyncpa [#allocation9], 0
    %s19 = scalar_lea.sflag [#allocation9], 1
    %20 = vsyncpa %s19, 0
    loop: start=0, step=1, limit=4
    $region2: #{tpu_custom_call.1} parent=1 // loop_pre_header
      _
    $region3: #{tpu_custom_call.1} parent=1 // loop_header
      %s22 = sphi 0, %s26
      %p23 = scmp.ge.s32.totalorder %s22, 4
      %s29 = sphi 0, %s48
      %s30 = sphi 0, %s44
      %s31 = sphi 0, %s40
      %s32 = sphi 0, %s29
      %s33 = sphi 0, %s30
      %s34 = sphi 0, %s31
      %s35 = sphi 0, %s32
      %s36 = sphi 0, %s33
      %s37 = sphi 0, %s34
      %s53 = sphi 0, %s55
      %s56 = sphi 0, %s53
      %s57 = sphi 0, %s56
      %s73 = sphi 0, %s57
      %s81 = sphi 0, %s83
      %s84 = sphi 0, %s81
      %s85 = sphi 0, %s84
      %s101 = sphi 0, %s85
      %s109 = sphi 0, %s111
      %s112 = sphi 0, %s109
      %s113 = sphi 0, %s112
      %s129 = sphi 0, %s113
      %s133 = sphi 0, %s133
      %s135 = sphi 0, %s133
      %s136 = sphi 0, %s135
      %s150 = sphi 0, %s136
      %s154 = sphi 0, %s154
      %s156 = sphi 0, %s154
      %s157 = sphi 0, %s156
      %s171 = sphi 0, %s157
      %s175 = sphi 0, %s175
      %s177 = sphi 0, %s175
      %s178 = sphi 0, %s177
      %s192 = sphi 0, %s178
      %s200 = sphi 0, %s202
      %s203 = sphi 0, %s200
      %s204 = sphi 0, %s203
      %s220 = sphi 0, %s204
    $region4: #{tpu_custom_call.1} parent=1 // loop_header_branch
      %25 = sbr.rel (%p23) target = $region8
    $region5: #{tpu_custom_call.1} parent=1 // loop_body
      %s27 = ssub.s32 %s22, 1
      %s28 = ssub.s32 %s22, 2
      %s38 = sadd.s32 1, %s31
      %p39 = scmp.ge.s32.totalorder %s38, 1
      %s40 = scalar_select %p39, 0, %s38
      %s41 = sadd.s32 1, %s30
      %s42 = scalar_select %p39, %s41, %s30
      %p43 = scmp.ge.s32.totalorder %s42, 1
      %s44 = scalar_select %p43, 0, %s42
      %s45 = sadd.s32 1, %s29
      %s46 = scalar_select %p43, %s45, %s29
      %p47 = scmp.ge.s32.totalorder %s46, 2
      %s48 = scalar_select %p47, 0, %s46
      %s49 = ssub.s32 %s29, %s48
      %s50 = ssub.s32 %s30, %s44
      %s51 = sor.u32 %s49, %s50
      %p52 = scmp.eq.s32.totalorder %s51, 0
      %s54 = sadd.s32 %s53, 1
      %s55 = scalar_select %p52, %s53, %s54
      %p58 = pneg %p52
      %p59 = scmp.eq.s32.totalorder %s22, 1
      %p60 = por %p58, %p59
      %p61 = scmp.ne.s32.totalorder %s53, %s56
      %p62 = scmp.eq.s32.totalorder %s22, 0
      %p63 = por %p61, %p62
      %p64 = scmp.ne.s32.totalorder %s53, %s56
      %p65 = scmp.eq.s32.totalorder %s27, 1
      %p66 = por %p64, %p65
      %p67 = scmp.ne.s32.totalorder %s56, %s57
      %p68 = scmp.eq.s32.totalorder %s27, 0
      %p69 = por %p67, %p68
      %p70 = scmp.ne.s32.totalorder %s56, %s57
      %p71 = scmp.eq.s32.totalorder %s28, 1
      %p72 = por %p70, %p71
      %p74 = scmp.ne.s32.totalorder %s57, %s73
      %p75 = scmp.eq.s32.totalorder %s28, 0
      %p76 = por %p74, %p75
      %s77 = ssub.s32 %s29, %s48
      %s78 = ssub.s32 %s31, %s40
      %s79 = sor.u32 %s77, %s78
      %p80 = scmp.eq.s32.totalorder %s79, 0
      %s82 = sadd.s32 %s81, 1
      %s83 = scalar_select %p80, %s81, %s82
      %p86 = pneg %p80
      %p87 = scmp.eq.s32.totalorder %s22, 1
      %p88 = por %p86, %p87
      %p89 = scmp.ne.s32.totalorder %s81, %s84
      %p90 = scmp.eq.s32.totalorder %s22, 0
      %p91 = por %p89, %p90
      %p92 = scmp.ne.s32.totalorder %s81, %s84
      %p93 = scmp.eq.s32.totalorder %s27, 1
      %p94 = por %p92, %p93
      %p95 = scmp.ne.s32.totalorder %s84, %s85
      %p96 = scmp.eq.s32.totalorder %s27, 0
      %p97 = por %p95, %p96
      %p98 = scmp.ne.s32.totalorder %s84, %s85
      %p99 = scmp.eq.s32.totalorder %s28, 1
      %p100 = por %p98, %p99
      %p102 = scmp.ne.s32.totalorder %s85, %s101
      %p103 = scmp.eq.s32.totalorder %s28, 0
      %p104 = por %p102, %p103
      %s105 = ssub.s32 %s29, %s48
      %s106 = ssub.s32 %s31, %s40
      %s107 = sor.u32 %s105, %s106
      %p108 = scmp.eq.s32.totalorder %s107, 0
      %s110 = sadd.s32 %s109, 1
      %s111 = scalar_select %p108, %s109, %s110
      %p114 = pneg %p108
      %p115 = scmp.eq.s32.totalorder %s22, 1
      %p116 = por %p114, %p115
      %p117 = scmp.ne.s32.totalorder %s109, %s112
      %p118 = scmp.eq.s32.totalorder %s22, 0
      %p119 = por %p117, %p118
      %p120 = scmp.ne.s32.totalorder %s109, %s112
      %p121 = scmp.eq.s32.totalorder %s27, 1
      %p122 = por %p120, %p121
      %p123 = scmp.ne.s32.totalorder %s112, %s113
      %p124 = scmp.eq.s32.totalorder %s27, 0
      %p125 = por %p123, %p124
      %p126 = scmp.ne.s32.totalorder %s112, %s113
      %p127 = scmp.eq.s32.totalorder %s28, 1
      %p128 = por %p126, %p127
      %p130 = scmp.ne.s32.totalorder %s113, %s129
      %p131 = scmp.eq.s32.totalorder %s28, 0
      %p132 = por %p130, %p131
      %s134 = sadd.s32 %s133, 1
      %p137 = scmp.eq.s32.totalorder %s22, 1
      %p138 = scmp.ne.s32.totalorder %s133, %s135
      %p139 = scmp.eq.s32.totalorder %s22, 0
      %p140 = por %p138, %p139
      %p141 = scmp.ne.s32.totalorder %s133, %s135
      %p142 = scmp.eq.s32.totalorder %s27, 1
      %p143 = por %p141, %p142
      %p144 = scmp.ne.s32.totalorder %s135, %s136
      %p145 = scmp.eq.s32.totalorder %s27, 0
      %p146 = por %p144, %p145
      %p147 = scmp.ne.s32.totalorder %s135, %s136
      %p148 = scmp.eq.s32.totalorder %s28, 1
      %p149 = por %p147, %p148
      %p151 = scmp.ne.s32.totalorder %s136, %s150
      %p152 = scmp.eq.s32.totalorder %s28, 0
      %p153 = por %p151, %p152
      %s155 = sadd.s32 %s154, 1
      %p158 = scmp.eq.s32.totalorder %s22, 1
      %p159 = scmp.ne.s32.totalorder %s154, %s156
      %p160 = scmp.eq.s32.totalorder %s22, 0
      %p161 = por %p159, %p160
      %p162 = scmp.ne.s32.totalorder %s154, %s156
      %p163 = scmp.eq.s32.totalorder %s27, 1
      %p164 = por %p162, %p163
      %p165 = scmp.ne.s32.totalorder %s156, %s157
      %p166 = scmp.eq.s32.totalorder %s27, 0
      %p167 = por %p165, %p166
      %p168 = scmp.ne.s32.totalorder %s156, %s157
      %p169 = scmp.eq.s32.totalorder %s28, 1
      %p170 = por %p168, %p169
      %p172 = scmp.ne.s32.totalorder %s157, %s171
      %p173 = scmp.eq.s32.totalorder %s28, 0
      %p174 = por %p172, %p173
      %s176 = sadd.s32 %s175, 1
      %p179 = scmp.eq.s32.totalorder %s22, 1
      %p180 = scmp.ne.s32.totalorder %s175, %s177
      %p181 = scmp.eq.s32.totalorder %s22, 0
      %p182 = por %p180, %p181
      %p183 = scmp.ne.s32.totalorder %s175, %s177
      %p184 = scmp.eq.s32.totalorder %s27, 1
      %p185 = por %p183, %p184
      %p186 = scmp.ne.s32.totalorder %s177, %s178
      %p187 = scmp.eq.s32.totalorder %s27, 0
      %p188 = por %p186, %p187
      %p189 = scmp.ne.s32.totalorder %s177, %s178
      %p190 = scmp.eq.s32.totalorder %s28, 1
      %p191 = por %p189, %p190
      %p193 = scmp.ne.s32.totalorder %s178, %s192
      %p194 = scmp.eq.s32.totalorder %s28, 0
      %p195 = por %p193, %p194
      %s196 = ssub.s32 %s29, %s48
      %s197 = ssub.s32 %s30, %s44
      %s198 = sor.u32 %s196, %s197
      %p199 = scmp.eq.s32.totalorder %s198, 0
      %s201 = sadd.s32 %s200, 1
      %s202 = scalar_select %p199, %s200, %s201
      %p205 = pneg %p199
      %p206 = scmp.eq.s32.totalorder %s22, 1
      %p207 = por %p205, %p206
      %p208 = scmp.ne.s32.totalorder %s200, %s203
      %p209 = scmp.eq.s32.totalorder %s22, 0
      %p210 = por %p208, %p209
      %p211 = scmp.ne.s32.totalorder %s200, %s203
      %p212 = scmp.eq.s32.totalorder %s27, 1
      %p213 = por %p211, %p212
      %p214 = scmp.ne.s32.totalorder %s203, %s204
      %p215 = scmp.eq.s32.totalorder %s27, 0
      %p216 = por %p214, %p215
      %p217 = scmp.ne.s32.totalorder %s203, %s204
      %p218 = scmp.eq.s32.totalorder %s28, 1
      %p219 = por %p217, %p218
      %p221 = scmp.ne.s32.totalorder %s204, %s220
      %p222 = scmp.eq.s32.totalorder %s28, 0
      %p223 = por %p221, %p222
      %p224 = scmp.le.s32.totalorder 1, %s22
      %p225 = scmp.lt.s32.totalorder %s22, 3
      %p226 = pnand %p224, %p225
      %p227 = pneg %p226
      // Predicated region
      $region9: #{tpu_custom_call.1} parent=5 // pred_check
        _
      $region10: #{tpu_custom_call.1} parent=5 // pred_check_branch
        %229 = sbr.rel (%p226) target = $region12
      $region11: #{tpu_custom_call.1} parent=5 // pred_region
        %s230 = ssub.s32 %s22, 1
        // Predicated region
        $region13: #{tpu_custom_call.1} parent=11 // pred_check
          %p231 = pneg %p146
        $region14: #{tpu_custom_call.1} parent=11 // pred_check_branch
          %233 = sbr.rel (%p231) target = $region16
        $region15: #{tpu_custom_call.1} parent=11 // pred_region
          _
        $region16: #{tpu_custom_call.1} parent=11 // pred_fallthru
          _
        // Predicated region
        $region17: #{tpu_custom_call.1} parent=11 // pred_check
          %p234 = pneg %p167
        $region18: #{tpu_custom_call.1} parent=11 // pred_check_branch
          %236 = sbr.rel (%p234) target = $region20
        $region19: #{tpu_custom_call.1} parent=11 // pred_region
          _
        $region20: #{tpu_custom_call.1} parent=11 // pred_fallthru
          _
        // Predicated region
        $region21: #{tpu_custom_call.1} parent=11 // pred_check
          %p237 = pneg %p188
        $region22: #{tpu_custom_call.1} parent=11 // pred_check_branch
          %239 = sbr.rel (%p237) target = $region24
        $region23: #{tpu_custom_call.1} parent=11 // pred_region
          _
        $region24: #{tpu_custom_call.1} parent=11 // pred_fallthru
          _
      $region12: #{tpu_custom_call.1} parent=5 // pred_fallthru
        _
      %p240 = scmp.lt.s32.totalorder %s22, 2
      // Predicated region
      $region25: #{tpu_custom_call.1} parent=5 // pred_check
        %p241 = pneg %p240
      $region26: #{tpu_custom_call.1} parent=5 // pred_check_branch
        %243 = sbr.rel (%p241) target = $region28
      $region27: #{tpu_custom_call.1} parent=5 // pred_region
        // Predicated region
        $region29: #{tpu_custom_call.1} parent=27 // pred_check
          %p244 = pneg %p63
        $region30: #{tpu_custom_call.1} parent=27 // pred_check_branch
          %246 = sbr.rel (%p244) target = $region32
        $region31: #{tpu_custom_call.1} parent=27 // pred_region
          %s247 = sand.u32 %s53, 1
          %s248 = scalar_lea.sflag [#allocation8], %s247
          %s249 = sand.u32 %s53, 1
          %s250 = smul.addr %s249, 16
          %s251 = scalar_lea.vmem [#allocation7], %s250
          %s253 = ssub.s32 256, 256
          %254 = vsyncadd %s248, %s253
          %s255 = smul.addr %s29, 2
          %s256 = sadd.s32 %s30, %s255
          %s257 = smul.addr %s256, 128
          %s258 = scalar_lea.hbm %s0, %s257
          %s259 = sshll.u32 %s251, 4
          %s260 = int_to_ptr.vmem [resolvable:$true] %s259
          %265 = dma.hbm_to_vmem [thread:$0]  %s258, 256, %s260, %s248, 128, 128, 8
        $region32: #{tpu_custom_call.1} parent=27 // pred_fallthru
          _
        // Predicated region
        $region33: #{tpu_custom_call.1} parent=27 // pred_check
          %p266 = pneg %p91
        $region34: #{tpu_custom_call.1} parent=27 // pred_check_branch
          %268 = sbr.rel (%p266) target = $region36
        $region35: #{tpu_custom_call.1} parent=27 // pred_region
          %p269 = scmp.lt.s32.totalorder %s29, 1
          %s270 = scalar_select %p269, %s29, 1
          %p271 = scmp.lt.s32.totalorder %s31, 0
          %s272 = scalar_select %p271, %s31, 0
          %s273 = smul.addr %s270, 2
          %s274 = sadd.s32 %s272, %s273
          %s275 = smul.addr %s274, 4
          %s276 = scalar_lea.vmem %s1, %s275
        $region36: #{tpu_custom_call.1} parent=27 // pred_fallthru
          _
        // Predicated region
        $region37: #{tpu_custom_call.1} parent=27 // pred_check
          %p277 = pneg %p119
        $region38: #{tpu_custom_call.1} parent=27 // pred_check_branch
          %279 = sbr.rel (%p277) target = $region40
        $region39: #{tpu_custom_call.1} parent=27 // pred_region
          %s280 = sand.u32 %s109, 1
          %s281 = scalar_lea.sflag [#allocation11], %s280
          %s282 = sand.u32 %s109, 1
          %s283 = smul.addr %s282, 8
          %s284 = scalar_lea.vmem [#allocation10], %s283
          %s286 = ssub.s32 128, 128
          %287 = vsyncadd %s281, %s286
          %s288 = smul.addr %s29, 2
          %s289 = sadd.s32 %s31, %s288
          %s290 = smul.addr %s289, 64
          %s291 = scalar_lea.hbm %s2, %s290
          %s292 = sshll.u32 %s284, 4
          %s293 = int_to_ptr.vmem [resolvable:$true] %s292
          %298 = dma.hbm_to_vmem [thread:$0]  %s291, 128, %s293, %s281, 64, 64, 4
        $region40: #{tpu_custom_call.1} parent=27 // pred_fallthru
          _
      $region28: #{tpu_custom_call.1} parent=5 // pred_fallthru
        _
      %p299 = scmp.le.s32.totalorder 1, %s22
      %p300 = scmp.lt.s32.totalorder %s22, 3
      %p301 = pnand %p299, %p300
      %p302 = pneg %p301
      // Predicated region
      $region41: #{tpu_custom_call.1} parent=5 // pred_check
        _
      $region42: #{tpu_custom_call.1} parent=5 // pred_check_branch
        %304 = sbr.rel (%p301) target = $region44
      $region43: #{tpu_custom_call.1} parent=5 // pred_region
        %s305 = ssub.s32 %s22, 1
        %s306 = sand.u32 %s56, 1
        %s307 = scalar_lea.sflag [#allocation8], %s306
        %s308 = sand.u32 %s56, 1
        %s309 = smul.addr %s308, 16
        %s310 = scalar_lea.vmem [#allocation7], %s309
        // Predicated region
        $region45: #{tpu_custom_call.1} parent=43 // pred_check
          %p311 = pneg %p69
        $region46: #{tpu_custom_call.1} parent=43 // pred_check_branch
          %313 = sbr.rel (%p311) target = $region48
        $region47: #{tpu_custom_call.1} parent=43 // pred_region
          %314 = dma.done %s307, 256
        $region48: #{tpu_custom_call.1} parent=43 // pred_fallthru
          _
        %s315 = sand.u32 %s112, 1
        %s316 = scalar_lea.sflag [#allocation11], %s315
        %s317 = sand.u32 %s112, 1
        %s318 = smul.addr %s317, 8
        %s319 = scalar_lea.vmem [#allocation10], %s318
        // Predicated region
        $region49: #{tpu_custom_call.1} parent=43 // pred_check
          %p320 = pneg %p125
        $region50: #{tpu_custom_call.1} parent=43 // pred_check_branch
          %322 = sbr.rel (%p320) target = $region52
        $region51: #{tpu_custom_call.1} parent=43 // pred_region
          %323 = dma.done %s316, 128
        $region52: #{tpu_custom_call.1} parent=43 // pred_fallthru
          _
        %s324 = sand.u32 %s56, 1
        %s325 = scalar_lea.sflag [#allocation8], %s324
        %s326 = sand.u32 %s56, 1
        %s327 = smul.addr %s326, 16
        %s328 = scalar_lea.vmem [#allocation7], %s327
        %p329 = pneg %p69
        %p330 = pneg %p66
        %p331 = scmp.lt.s32.totalorder %s32, 1
        %s332 = scalar_select %p331, %s32, 1
        %p333 = scmp.lt.s32.totalorder %s34, 0
        %s334 = scalar_select %p333, %s34, 0
        %s335 = smul.addr %s332, 2
        %s336 = sadd.s32 %s334, %s335
        %s337 = smul.addr %s336, 4
        %s338 = scalar_lea.vmem %s1, %s337
        %p339 = pneg %p97
        %p340 = pneg %p94
        %s341 = sand.u32 %s112, 1
        %s342 = scalar_lea.sflag [#allocation11], %s341
        %s343 = sand.u32 %s112, 1
        %s344 = smul.addr %s343, 8
        %s345 = scalar_lea.vmem [#allocation10], %s344
        %p346 = pneg %p125
        %p347 = pneg %p122
        %p348 = pneg %p146
        %p349 = pneg %p143
        %p350 = pneg %p167
        %p351 = pneg %p164
        %p352 = pneg %p188
        %p353 = pneg %p185
        %p354 = pneg %p216
        %p355 = pneg %p213
        %s356 = sand.u32 %s203, 1
        %s357 = scalar_lea.sflag [#allocation9], %s356
        %s358 = sand.u32 %s203, 1
        %s359 = smul.addr %s358, 16
        %s360 = scalar_lea.vmem [#allocation12], %s359
        %p361 = scmp.lt.s32.totalorder %s32, 1
        %s362 = scalar_select %p361, %s32, 1
        %p363 = scmp.lt.s32.totalorder %s34, 0
        %s364 = scalar_select %p363, %s34, 0
        %s365 = smul.addr %s362, 2
        %s366 = sadd.s32 %s364, %s365
        %s367 = smul.addr %s366, 4
        %s368 = scalar_lea.vmem %s1, %s367
        %p370 = scmp.eq.s32.totalorder %s34, 0
        // Predicated region
        $region53: #{tpu_custom_call.1} parent=43 // pred_check
          %p371 = pneg %p370
        $region54: #{tpu_custom_call.1} parent=43 // pred_check_branch
          %373 = sbr.rel (%p371) target = $region56
        $region55: #{tpu_custom_call.1} parent=43 // pred_region
          %v374 = vld [vmem:[%s310] sm:$0xff]
          %v375 = vld [vmem:[%s310 + $0x8] sm:$0xff]
          %v376 = vpack.c.bf16 %v375, %v374
          %v377 = vld [vmem:[%s3] sm:$0xf]
          %v378 = vld [vmem:[%s3 + $0x4] sm:$0xf]
          %v379 = vld [vmem:[%s4] sm:$0xff]
          %v380 = vld [vmem:[%s4 + $0x8] sm:$0xff]
          %382 = vset.pattern.permute.xlu0 0
          %383 = vperm.xlu0 %382, %v379
          %v384 = vpop.permute.xlu0 %383
          %387 = vset.pattern.permute.xlu0 0
          %388 = vperm.xlu0 %387, %v380
          %v389 = vpop.permute.xlu0 %388
          %v393 = vunpack.c.l.b16 %v377
          %v394 = vunpack.c.l.b16 %v378
          %v395 = vpack.c.b16 %v394, %v393
          %vm396 = vcmask 130048
          %v398 = vsel %vm396, %v395, 0
          %400 = vmatprep.subr.bf16.mxu0 0
          %401 = vmatpush1.bf16.msra.mxu0 %v376
          %402 = vmatprep.subr.bf16.mxu0 0
          %403 = vmatpush1.bf16.msra.mxu0 0
          %404 = vmatprep.subr.bf16.mxu0 0
          %405 = vmatpush1.bf16.msra.mxu0 0
          %406 = vmatprep.subr.bf16.mxu0 0
          %407 = vmatpush1.bf16.msra.mxu0 0
          %408 = vmatprep.subr.bf16.mxu0 0
          %409 = vmatpush1.bf16.msra.mxu0 0
          %410 = vmatprep.subr.bf16.mxu0 0
          %411 = vmatpush1.bf16.msra.mxu0 0
          %412 = vmatprep.subr.bf16.mxu0 0
          %413 = vmatpush1.bf16.msra.mxu0 0
          %414 = vmatprep.subr.bf16.mxu0 0
          %415 = vmatpush1.bf16.msra.mxu0 0
          %416 = vmatprep.subr.bf16.mxu0 0
          %417 = vmatpush1.bf16.msra.mxu0 0
          %418 = vmatprep.subr.bf16.mxu0 0
          %419 = vmatpush1.bf16.msra.mxu0 0
          %420 = vmatprep.subr.bf16.mxu0 0
          %421 = vmatpush1.bf16.msra.mxu0 0
          %422 = vmatprep.subr.bf16.mxu0 0
          %423 = vmatpush1.bf16.msra.mxu0 0
          %424 = vmatprep.subr.bf16.mxu0 0
          %425 = vmatpush1.bf16.msra.mxu0 0
          %426 = vmatprep.subr.bf16.mxu0 0
          %427 = vmatpush1.bf16.msra.mxu0 0
          %428 = vmatprep.subr.bf16.mxu0 0
          %429 = vmatpush1.bf16.msra.mxu0 0
          %430 = vmatprep.subr.bf16.mxu0 0
          %431 = vmatpush1.bf16.msra.mxu0 0
          %432 = vmatprep.mubr.bf16.mxu0 0
          %433 = vmatmul.mubr.bf16.gmra.mrb[0].mxu0 %v398
          %v434 = vpop.f32.mrb[0].mxu0
          %v435 = vadd.f32 %v384, %v434
          %v436 = vpop.f32.mrb[0].mxu0
          %v437 = vpop.f32.mrb[0].mxu0
          %v438 = vadd.f32 %v389, %v437
          %v439 = vpop.f32.mrb[0].mxu0
          %440 = vdwg.mxu0
          %v441 = vpack.c.bf16 %v438, %v435
          %442 = vst [vmem:[#allocation2] sm:$0xff] %v441
          %443 = vst [vmem:[#allocation3] sm:$0x1] -inf
          %444 = vst [vmem:[#allocation4] sm:$0x1] 0.0
          %445 = vst [vmem:[#allocation5] sm:$0xff] 0.0
          %446 = vst [vmem:[#allocation5 + $0x8] sm:$0xff] 0.0
        $region56: #{tpu_custom_call.1} parent=43 // pred_fallthru
          _
        %v447 = vld [vmem:[%s368] sm:$0xf]
        %v448 = vld [vmem:[%s368 + $0x4] sm:$0xf]
        %v449 = vld [vmem:[%s319] sm:$0xf]
        %v450 = vld [vmem:[%s319 + $0x4] sm:$0xf]
        %v451 = vld [vmem:[#allocation2] sm:$0xff]
        %v454 = vunpack.c.l.b16 %v447
        %v455 = vunpack.c.l.b16 %v448
        %v456 = vpack.c.b16 %v455, %v454
        %458 = vxpose.xlu0.c.b16.start [1/8] %v456, 128
        %459 = vxpose.xlu0.c.b16.cont [2/8] 0, 128
        %460 = vxpose.xlu0.c.b16.cont [3/8] 0, 128
        %461 = vxpose.xlu0.c.b16.cont [4/8] 0, 128
        %462 = vxpose.xlu0.c.b16.cont [5/8] 0, 128
        %463 = vxpose.xlu0.c.b16.cont [6/8] 0, 128
        %464 = vxpose.xlu0.c.b16.cont [7/8] 0, 128
        %465 = vxpose.xlu0.c.b16.end [8/8] 0, 128
        %v466 = vpop.trf.xlu0
        %v467 = vpop.trf.xlu0
        %v468 = vpop.trf.xlu0
        %v469 = vpop.trf.xlu0
        %v470 = vpop.trf.xlu0
        %v471 = vpop.trf.xlu0
        %v472 = vpop.trf.xlu0
        %v473 = vpop.trf.xlu0
        %vm474 = vcmask 130048
        %v476 = vsel %vm474, %v466, 0
        %v479 = vsel %vm474, %v467, 0
        %v482 = vsel %vm474, %v468, 0
        %v485 = vsel %vm474, %v469, 0
        %v488 = vsel %vm474, %v470, 0
        %v491 = vsel %vm474, %v471, 0
        %v494 = vsel %vm474, %v472, 0
        %v497 = vsel %vm474, %v473, 0
        %499 = vmatprep.subr.bf16.mxu0 0
        %500 = vmatpush1.bf16.msra.mxu0 %v451
        %501 = vmatprep.subr.bf16.mxu0 0
        %502 = vmatpush1.bf16.msra.mxu0 0
        %503 = vmatprep.subr.bf16.mxu0 0
        %504 = vmatpush1.bf16.msra.mxu0 0
        %505 = vmatprep.subr.bf16.mxu0 0
        %506 = vmatpush1.bf16.msra.mxu0 0
        %507 = vmatprep.subr.bf16.mxu0 0
        %508 = vmatpush1.bf16.msra.mxu0 0
        %509 = vmatprep.subr.bf16.mxu0 0
        %510 = vmatpush1.bf16.msra.mxu0 0
        %511 = vmatprep.subr.bf16.mxu0 0
        %512 = vmatpush1.bf16.msra.mxu0 0
        %513 = vmatprep.subr.bf16.mxu0 0
        %514 = vmatpush1.bf16.msra.mxu0 0
        %515 = vmatprep.subr.bf16.mxu0 0
        %516 = vmatpush1.bf16.msra.mxu0 0
        %517 = vmatprep.subr.bf16.mxu0 0
        %518 = vmatpush1.bf16.msra.mxu0 0
        %519 = vmatprep.subr.bf16.mxu0 0
        %520 = vmatpush1.bf16.msra.mxu0 0
        %521 = vmatprep.subr.bf16.mxu0 0
        %522 = vmatpush1.bf16.msra.mxu0 0
        %523 = vmatprep.subr.bf16.mxu0 0
        %524 = vmatpush1.bf16.msra.mxu0 0
        %525 = vmatprep.subr.bf16.mxu0 0
        %526 = vmatpush1.bf16.msra.mxu0 0
        %527 = vmatprep.subr.bf16.mxu0 0
        %528 = vmatpush1.bf16.msra.mxu0 0
        %529 = vmatprep.subr.bf16.mxu0 0
        %530 = vmatpush1.bf16.msra.mxu0 0
        %531 = vmatprep.mubr.bf16.mxu0 0
        %532 = vmatmul.mubr.bf16.gmra.mrb[0].mxu0 %v476
        %v533 = vpop.f32.mrb[0].mxu0
        %v534 = vadd.f32 0.0, %v533
        %v535 = vpop.f32.mrb[0].mxu0
        %v536 = vpop.f32.mrb[0].mxu0
        %v537 = vadd.f32 0.0, %v536
        %v538 = vpop.f32.mrb[0].mxu0
        %539 = vmatprep.mubr.bf16.mxu0 0
        %540 = vmatmul.mubr.bf16.gmra.mrb[0].mxu0 %v479
        %v541 = vpop.f32.mrb[0].mxu0
        %v542 = vadd.f32 0.0, %v541
        %v543 = vpop.f32.mrb[0].mxu0
        %v544 = vpop.f32.mrb[0].mxu0
        %v545 = vadd.f32 0.0, %v544
        %v546 = vpop.f32.mrb[0].mxu0
        %547 = vmatprep.mubr.bf16.mxu0 0
        %548 = vmatmul.mubr.bf16.gmra.mrb[0].mxu0 %v482
        %v549 = vpop.f32.mrb[0].mxu0
        %v550 = vadd.f32 0.0, %v549
        %v551 = vpop.f32.mrb[0].mxu0
        %v552 = vpop.f32.mrb[0].mxu0
        %v553 = vadd.f32 0.0, %v552
        %v554 = vpop.f32.mrb[0].mxu0
        %555 = vmatprep.mubr.bf16.mxu0 0
        %556 = vmatmul.mubr.bf16.gmra.mrb[0].mxu0 %v485
        %v557 = vpop.f32.mrb[0].mxu0
        %v558 = vadd.f32 0.0, %v557
        %v559 = vpop.f32.mrb[0].mxu0
        %v560 = vpop.f32.mrb[0].mxu0
        %v561 = vadd.f32 0.0, %v560
        %v562 = vpop.f32.mrb[0].mxu0
        %563 = vmatprep.mubr.bf16.mxu0 0
        %564 = vmatmul.mubr.bf16.gmra.mrb[0].mxu0 %v488
        %v565 = vpop.f32.mrb[0].mxu0
        %v566 = vadd.f32 0.0, %v565
        %v567 = vpop.f32.mrb[0].mxu0
        %v568 = vpop.f32.mrb[0].mxu0
        %v569 = vadd.f32 0.0, %v568
        %v570 = vpop.f32.mrb[0].mxu0
        %571 = vmatprep.mubr.bf16.mxu0 0
        %572 = vmatmul.mubr.bf16.gmra.mrb[0].mxu0 %v491
        %v573 = vpop.f32.mrb[0].mxu0
        %v574 = vadd.f32 0.0, %v573
        %v575 = vpop.f32.mrb[0].mxu0
        %v576 = vpop.f32.mrb[0].mxu0
        %v577 = vadd.f32 0.0, %v576
        %v578 = vpop.f32.mrb[0].mxu0
        %579 = vmatprep.mubr.bf16.mxu0 0
        %580 = vmatmul.mubr.bf16.gmra.mrb[0].mxu0 %v494
        %v581 = vpop.f32.mrb[0].mxu0
        %v582 = vadd.f32 0.0, %v581
        %v583 = vpop.f32.mrb[0].mxu0
        %v584 = vpop.f32.mrb[0].mxu0
        %v585 = vadd.f32 0.0, %v584
        %v586 = vpop.f32.mrb[0].mxu0
        %587 = vmatprep.mubr.bf16.mxu0 0
        %588 = vmatmul.mubr.bf16.gmra.mrb[0].mxu0 %v497
        %v589 = vpop.f32.mrb[0].mxu0
        %v590 = vadd.f32 0.0, %v589
        %v591 = vpop.f32.mrb[0].mxu0
        %v592 = vpop.f32.mrb[0].mxu0
        %v593 = vadd.f32 0.0, %v592
        %v594 = vpop.f32.mrb[0].mxu0
        %595 = vdwg.mxu0
        %s596 = smul.u32 %s34, 128
        %v597 = vlaneseq
        %v598 = vshrl.u32 %v597, 7
        %v599 = vadd.s32 %v598, 8
        %v600 = vadd.s32 %v598, 16
        %v601 = vadd.s32 %v598, 24
        %v602 = vadd.s32 %v598, 32
        %v603 = vadd.s32 %v598, 40
        %v604 = vadd.s32 %v598, 48
        %v605 = vadd.s32 %v598, 56
        %v606 = vadd.s32 %v598, 64
        %v607 = vadd.s32 %v598, 72
        %v608 = vadd.s32 %v598, 80
        %v609 = vadd.s32 %v598, 88
        %v610 = vadd.s32 %v598, 96
        %v611 = vadd.s32 %v598, 104
        %v612 = vadd.s32 %v598, 112
        %v613 = vadd.s32 %v598, 120
        %v614 = vstv %s596
        %v615 = vadd.s32 %v614, %v598
        %v616 = vadd.s32 %v614, %v599
        %v617 = vadd.s32 %v614, %v600
        %v618 = vadd.s32 %v614, %v601
        %v619 = vadd.s32 %v614, %v602
        %v620 = vadd.s32 %v614, %v603
        %v621 = vadd.s32 %v614, %v604
        %v622 = vadd.s32 %v614, %v605
        %v623 = vadd.s32 %v614, %v606
        %v624 = vadd.s32 %v614, %v607
        %v625 = vadd.s32 %v614, %v608
        %v626 = vadd.s32 %v614, %v609
        %v627 = vadd.s32 %v614, %v610
        %v628 = vadd.s32 %v614, %v611
        %v629 = vadd.s32 %v614, %v612
        %v630 = vadd.s32 %v614, %v613
        %vm631 = vcmp.lt.s32.totalorder %v615, 64
        %vm632 = vcmp.lt.s32.totalorder %v616, 64
        %vm633 = vcmp.lt.s32.totalorder %v617, 64
        %vm634 = vcmp.lt.s32.totalorder %v618, 64
        %vm635 = vcmp.lt.s32.totalorder %v619, 64
        %vm636 = vcmp.lt.s32.totalorder %v620, 64
        %vm637 = vcmp.lt.s32.totalorder %v621, 64
        %vm638 = vcmp.lt.s32.totalorder %v622, 64
        %vm639 = vcmp.lt.s32.totalorder %v623, 64
        %vm640 = vcmp.lt.s32.totalorder %v624, 64
        %vm641 = vcmp.lt.s32.totalorder %v625, 64
        %vm642 = vcmp.lt.s32.totalorder %v626, 64
        %vm643 = vcmp.lt.s32.totalorder %v627, 64
        %vm644 = vcmp.lt.s32.totalorder %v628, 64
        %vm645 = vcmp.lt.s32.totalorder %v629, 64
        %vm646 = vcmp.lt.s32.totalorder %v630, 64
        %v647 = vsel %vm631, 1, 0
        %v648 = vsel %vm632, 1, 0
        %v649 = vsel %vm633, 1, 0
        %v650 = vsel %vm634, 1, 0
        %v651 = vsel %vm635, 1, 0
        %v652 = vsel %vm636, 1, 0
        %v653 = vsel %vm637, 1, 0
        %v654 = vsel %vm638, 1, 0
        %v655 = vsel %vm639, 1, 0
        %v656 = vsel %vm640, 1, 0
        %v657 = vsel %vm641, 1, 0
        %v658 = vsel %vm642, 1, 0
        %v659 = vsel %vm643, 1, 0
        %v660 = vsel %vm644, 1, 0
        %v661 = vsel %vm645, 1, 0
        %v662 = vsel %vm646, 1, 0
        %vm663 = vcmp.eq.s32.totalorder %v647, 1
        %vm664 = vcmp.eq.s32.totalorder %v648, 1
        %vm665 = vcmp.eq.s32.totalorder %v649, 1
        %vm666 = vcmp.eq.s32.totalorder %v650, 1
        %vm667 = vcmp.eq.s32.totalorder %v651, 1
        %vm668 = vcmp.eq.s32.totalorder %v652, 1
        %vm669 = vcmp.eq.s32.totalorder %v653, 1
        %vm670 = vcmp.eq.s32.totalorder %v654, 1
        %vm671 = vcmp.eq.s32.totalorder %v655, 1
        %vm672 = vcmp.eq.s32.totalorder %v656, 1
        %vm673 = vcmp.eq.s32.totalorder %v657, 1
        %vm674 = vcmp.eq.s32.totalorder %v658, 1
        %vm675 = vcmp.eq.s32.totalorder %v659, 1
        %vm676 = vcmp.eq.s32.totalorder %v660, 1
        %vm677 = vcmp.eq.s32.totalorder %v661, 1
        %vm678 = vcmp.eq.s32.totalorder %v662, 1
        %v679 = vsel %vm663, %v534, -1e+30
        %v680 = vsel %vm664, %v537, -1e+30
        %v681 = vsel %vm665, %v542, -1e+30
        %v682 = vsel %vm666, %v545, -1e+30
        %v683 = vsel %vm667, %v550, -1e+30
        %v684 = vsel %vm668, %v553, -1e+30
        %v685 = vsel %vm669, %v558, -1e+30
        %v686 = vsel %vm670, %v561, -1e+30
        %v687 = vsel %vm671, %v566, -1e+30
        %v688 = vsel %vm672, %v569, -1e+30
        %v689 = vsel %vm673, %v574, -1e+30
        %v690 = vsel %vm674, %v577, -1e+30
        %v691 = vsel %vm675, %v582, -1e+30
        %v692 = vsel %vm676, %v585, -1e+30
        %v693 = vsel %vm677, %v590, -1e+30
        %v694 = vsel %vm678, %v593, -1e+30
        %v695 = vld [vmem:[#allocation3] sm:$0x1]
        %v696 = vmax.f32 %v679, %v683
        %v697 = vmax.f32 %v680, %v684
        %v698 = vmax.f32 %v681, %v685
        %v699 = vmax.f32 %v682, %v686
        %v700 = vmax.f32 %v696, %v687
        %v701 = vmax.f32 %v697, %v688
        %v702 = vmax.f32 %v698, %v689
        %v703 = vmax.f32 %v699, %v690
        %v704 = vmax.f32 %v700, %v691
        %v705 = vmax.f32 %v701, %v692
        %v706 = vmax.f32 %v702, %v693
        %v707 = vmax.f32 %v703, %v694
        %v708 = vmax.f32 %v704, %v705
        %v709 = vmax.f32 %v706, %v707
        %v710 = vmax.f32 %v708, %v709
        %v711 = vrot.slane %v710, 4
        %v712 = vmax.f32 %v710, %v711
        %v713 = vrot.slane %v712, 2
        %v714 = vmax.f32 %v712, %v713
        %v715 = vrot.slane %v714, 1
        %v716 = vmax.f32 %v714, %v715
        %v717 = vmax.f32 %v695, %v716
        %v718 = vsub.f32 %v695, %v717
        %v719 = vmul.f32 %v718, 1.442695
        %v720 = vpow.pop %v719
        %v722 = vlaneseq
        %v723 = vshrl.u32 %v722, 7
        %v724 = vsub.s32 0, %v723
        %v725 = vrot.slane %v717, %v724
        %v727 = vsub.f32 %v679, %v725
        %v728 = vsub.f32 %v680, %v725
        %v729 = vsub.f32 %v681, %v725
        %v730 = vsub.f32 %v682, %v725
        %v731 = vsub.f32 %v683, %v725
        %v732 = vsub.f32 %v684, %v725
        %v733 = vsub.f32 %v685, %v725
        %v734 = vsub.f32 %v686, %v725
        %v735 = vsub.f32 %v687, %v725
        %v736 = vsub.f32 %v688, %v725
        %v737 = vsub.f32 %v689, %v725
        %v738 = vsub.f32 %v690, %v725
        %v739 = vsub.f32 %v691, %v725
        %v740 = vsub.f32 %v692, %v725
        %v741 = vsub.f32 %v693, %v725
        %v742 = vsub.f32 %v694, %v725
        %v743 = vmul.f32 %v727, 1.442695
        %v744 = vpow.pop %v743
        %v745 = vmul.f32 %v728, 1.442695
        %v746 = vpow.pop %v745
        %v747 = vmul.f32 %v729, 1.442695
        %v748 = vpow.pop %v747
        %v749 = vmul.f32 %v730, 1.442695
        %v750 = vpow.pop %v749
        %v751 = vmul.f32 %v731, 1.442695
        %v752 = vpow.pop %v751
        %v753 = vmul.f32 %v732, 1.442695
        %v754 = vpow.pop %v753
        %v755 = vmul.f32 %v733, 1.442695
        %v756 = vpow.pop %v755
        %v757 = vmul.f32 %v734, 1.442695
        %v758 = vpow.pop %v757
        %v759 = vmul.f32 %v735, 1.442695
        %v760 = vpow.pop %v759
        %v761 = vmul.f32 %v736, 1.442695
        %v762 = vpow.pop %v761
        %v763 = vmul.f32 %v737, 1.442695
        %v764 = vpow.pop %v763
        %v765 = vmul.f32 %v738, 1.442695
        %v766 = vpow.pop %v765
        %v767 = vmul.f32 %v739, 1.442695
        %v768 = vpow.pop %v767
        %v769 = vmul.f32 %v740, 1.442695
        %v770 = vpow.pop %v769
        %v771 = vmul.f32 %v741, 1.442695
        %v772 = vpow.pop %v771
        %v773 = vmul.f32 %v742, 1.442695
        %v774 = vpow.pop %v773
        %775 = vst [vmem:[#allocation3] sm:$0x1] %v717
        %v776 = vld [vmem:[#allocation4] sm:$0x1]
        %v777 = vmul.f32 %v720, %v776
        %v778 = vadd.f32 %v744, %v746
        %v779 = vadd.f32 %v778, %v748
        %v780 = vadd.f32 %v779, %v750
        %v781 = vadd.f32 %v780, %v752
        %v782 = vadd.f32 %v781, %v754
        %v783 = vadd.f32 %v782, %v756
        %v784 = vadd.f32 %v783, %v758
        %v785 = vadd.f32 %v784, %v760
        %v786 = vadd.f32 %v785, %v762
        %v787 = vadd.f32 %v786, %v764
        %v788 = vadd.f32 %v787, %v766
        %v789 = vadd.f32 %v788, %v768
        %v790 = vadd.f32 %v789, %v770
        %v791 = vadd.f32 %v790, %v772
        %v792 = vadd.f32 %v791, %v774
        %v793 = vrot.slane %v792, 4
        %v794 = vadd.f32 %v792, %v793
        %v795 = vrot.slane %v794, 2
        %v796 = vadd.f32 %v794, %v795
        %v797 = vrot.slane %v796, 1
        %v798 = vadd.f32 %v796, %v797
        %v799 = vadd.f32 %v777, %v798
        %800 = vst [vmem:[#allocation4] sm:$0x1] %v799
        %v801 = vld [vmem:[#allocation5] sm:$0xff]
        %v802 = vld [vmem:[#allocation5 + $0x8] sm:$0xff]
        %v804 = vlaneseq
        %v805 = vshrl.u32 %v804, 7
        %v806 = vsub.s32 0, %v805
        %v807 = vrot.slane %v720, %v806
        %v809 = vmul.f32 %v807, %v801
        %v810 = vmul.f32 %v807, %v802
        %v811 = vpack.c.bf16 %v746, %v744
        %v812 = vpack.c.bf16 %v750, %v748
        %v813 = vpack.c.bf16 %v754, %v752
        %v814 = vpack.c.bf16 %v758, %v756
        %v815 = vpack.c.bf16 %v762, %v760
        %v816 = vpack.c.bf16 %v766, %v764
        %v817 = vpack.c.bf16 %v770, %v768
        %v818 = vpack.c.bf16 %v774, %v772
        %v821 = vunpack.c.l.b16 %v449
        %v822 = vunpack.c.l.b16 %v450
        %v823 = vpack.c.b16 %v822, %v821
        %825 = vmatprep.subr.bf16.mxu0 0
        %826 = vmatpush1.bf16.msra.mxu0 %v811
        %827 = vmatprep.subr.bf16.mxu0 0
        %828 = vmatpush1.bf16.msra.mxu0 %v812
        %829 = vmatprep.subr.bf16.mxu0 0
        %830 = vmatpush1.bf16.msra.mxu0 %v813
        %831 = vmatprep.subr.bf16.mxu0 0
        %832 = vmatpush1.bf16.msra.mxu0 %v814
        %833 = vmatprep.subr.bf16.mxu0 0
        %834 = vmatpush1.bf16.msra.mxu0 %v815
        %835 = vmatprep.subr.bf16.mxu0 0
        %836 = vmatpush1.bf16.msra.mxu0 %v816
        %837 = vmatprep.subr.bf16.mxu0 0
        %838 = vmatpush1.bf16.msra.mxu0 %v817
        %839 = vmatprep.subr.bf16.mxu0 0
        %840 = vmatpush1.bf16.msra.mxu0 %v818
        %841 = vmatprep.subr.bf16.mxu0 0
        %842 = vmatpush1.bf16.msra.mxu0 0
        %843 = vmatprep.subr.bf16.mxu0 0
        %844 = vmatpush1.bf16.msra.mxu0 0
        %845 = vmatprep.subr.bf16.mxu0 0
        %846 = vmatpush1.bf16.msra.mxu0 0
        %847 = vmatprep.subr.bf16.mxu0 0
        %848 = vmatpush1.bf16.msra.mxu0 0
        %849 = vmatprep.subr.bf16.mxu0 0
        %850 = vmatpush1.bf16.msra.mxu0 0
        %851 = vmatprep.subr.bf16.mxu0 0
        %852 = vmatpush1.bf16.msra.mxu0 0
        %853 = vmatprep.subr.bf16.mxu0 0
        %854 = vmatpush1.bf16.msra.mxu0 0
        %855 = vmatprep.subr.bf16.mxu0 0
        %856 = vmatpush1.bf16.msra.mxu0 0
        %857 = vmatprep.mubr.bf16.mxu0 0
        %858 = vmatmul.mubr.bf16.gmra.mrb[0].mxu0 %v823
        %v859 = vpop.f32.mrb[0].mxu0
        %v860 = vadd.f32 0.0, %v859
        %v861 = vpop.f32.mrb[0].mxu0
        %v862 = vpop.f32.mrb[0].mxu0
        %v863 = vadd.f32 0.0, %v862
        %v864 = vpop.f32.mrb[0].mxu0
        %865 = vdwg.mxu0
        %v866 = vadd.f32 %v809, %v860
        %v867 = vadd.f32 %v810, %v863
        %868 = vst [vmem:[#allocation5] sm:$0xff] %v866
        %869 = vst [vmem:[#allocation5 + $0x8] sm:$0xff] %v867
        // Predicated region
        $region57: #{tpu_custom_call.1} parent=43 // pred_check
          %p870 = pneg %p370
        $region58: #{tpu_custom_call.1} parent=43 // pred_check_branch
          %872 = sbr.rel (%p870) target = $region60
        $region59: #{tpu_custom_call.1} parent=43 // pred_region
          %v873 = vld [vmem:[#allocation4] sm:$0x1]
          %v874 = vrcp.pop %v873
          %s875 = sld [smem:[#allocation6]]
          %v876 = vld [vmem:[#allocation5] sm:$0xff]
          %v877 = vld [vmem:[#allocation5 + $0x8] sm:$0xff]
          %v879 = vlaneseq
          %v880 = vshrl.u32 %v879, 7
          %v881 = vsub.s32 0, %v880
          %v882 = vrot.slane %v874, %v881
          %v884 = vmul.f32 %v876, %v882
          %v885 = vmul.f32 %v877, %v882
          %v886 = vstv %s875
          %v887 = vmul.f32 %v886, %v884
          %v888 = vmul.f32 %v886, %v885
          %v889 = vld [vmem:[%s310] sm:$0xff]
          %v890 = vld [vmem:[%s310 + $0x8] sm:$0xff]
          %v891 = vadd.f32 %v887, %v889
          %v892 = vadd.f32 %v888, %v890
          %893 = vst [vmem:[%s360] sm:$0xff] %v891
          %894 = vst [vmem:[%s360 + $0x8] sm:$0xff] %v892
        $region60: #{tpu_custom_call.1} parent=43 // pred_fallthru
          _
        %s895 = sand.u32 %s203, 1
        %s896 = scalar_lea.sflag [#allocation9], %s895
        %s897 = sand.u32 %s203, 1
        %s898 = smul.addr %s897, 16
        %s899 = scalar_lea.vmem [#allocation12], %s898
        // Predicated region
        $region61: #{tpu_custom_call.1} parent=43 // pred_check
          %p900 = pneg %p213
        $region62: #{tpu_custom_call.1} parent=43 // pred_check_branch
          %902 = sbr.rel (%p900) target = $region64
        $region63: #{tpu_custom_call.1} parent=43 // pred_region
          %s904 = ssub.s32 256, 256
          %905 = vsyncadd %s896, %s904
          %s906 = smul.addr %s32, 2
          %s907 = sadd.s32 %s33, %s906
          %s908 = smul.addr %s907, 128
          %s909 = scalar_lea.hbm %s6, %s908
          %s910 = sshll.u32 %s899, 4
          %s911 = int_to_ptr.vmem [resolvable:$true] %s910
          %916 = dma.vmem_to_hbm [thread:$0]  %s911, 256, %s909, %s896, 128, 128, 8
        $region64: #{tpu_custom_call.1} parent=43 // pred_fallthru
          _
      $region44: #{tpu_custom_call.1} parent=5 // pred_fallthru
        _
      %p917 = scmp.le.s32.totalorder 2, %s22
      // Predicated region
      $region65: #{tpu_custom_call.1} parent=5 // pred_check
        %p918 = pneg %p917
      $region66: #{tpu_custom_call.1} parent=5 // pred_check_branch
        %920 = sbr.rel (%p918) target = $region68
      $region67: #{tpu_custom_call.1} parent=5 // pred_region
        %s921 = ssub.s32 %s22, 2
        // Predicated region
        $region69: #{tpu_custom_call.1} parent=67 // pred_check
          %p922 = pneg %p219
        $region70: #{tpu_custom_call.1} parent=67 // pred_check_branch
          %924 = sbr.rel (%p922) target = $region72
        $region71: #{tpu_custom_call.1} parent=67 // pred_region
          %s925 = sand.u32 %s204, 1
          %s926 = scalar_lea.sflag [#allocation9], %s925
          %s927 = sand.u32 %s204, 1
          %s928 = smul.addr %s927, 16
          %s929 = scalar_lea.vmem [#allocation12], %s928
          %930 = dma.done %s926, 256
        $region72: #{tpu_custom_call.1} parent=67 // pred_fallthru
          _
      $region68: #{tpu_custom_call.1} parent=5 // pred_fallthru
        _
    $region6: #{tpu_custom_call.1} parent=1 // loop_footer
      %s26 = sadd.s32 1, %s22
    $region7: #{tpu_custom_call.1} parent=1 // loop_footer_branch
      %21 = sbr.rel target = $region3
    $region8: #{tpu_custom_call.1} parent=1 // loop_exit
      _
    %931 = vsyncpa [#allocation8], 1
    %s932 = scalar_lea.sflag [#allocation8], 1
    %933 = vsyncpa %s932, 1
    %934 = vsyncpa [#allocation11], 1
    %s935 = scalar_lea.sflag [#allocation11], 1
    %936 = vsyncpa %s935, 1
    %937 = vsyncpa [#allocation9], 1
    %s938 = scalar_lea.sflag [#allocation9], 1
    %939 = vsyncpa %s938, 1

</llo_original>
